<compile_context>
chip_gen: v6e
topology: v6e:2x2x1
jax: 0.10.0
libtpu: 0.0.40
codegen_flags: <defaults>
</compile_context>

<pallas_src>
import functools

import numpy as np
import jax
import jax.numpy as jnp
from jax.experimental import pallas as pl
from jax.experimental.pallas import tpu as pltpu


def _resnet_block_kernel(x_ref, w_ref, m_ref, o_ref, *, H, W, Cin, Cout, eps):
    # x_ref: (1, Cin, HW)   fp32 input for this sample (conv input AND residual)
    # w_ref: (Cout, 9*Cin)  bf16 conv weights, columns ordered (kh*3+kw)*Cin + cin
    # m_ref: (9, HW)        fp32 border masks (1 inside, 0 where a shifted tap would
    #                       read across the zero-padding border)
    # o_ref: (1, Cout, HW)  fp32 output (lane-dense: HW is a multiple of 128)
    HW = H * W
    xf = x_ref[0]          # (Cin, HW) fp32, resident; reused for taps + residual
    masks = m_ref[...]     # (9, HW)   fp32

    # Build the 9 shifted taps with static lane rotations (XLU) + border masking (VPU).
    taps = []
    for kh in range(3):
        for kw in range(3):
            t = kh * 3 + kw
            d = (kh - 1) * W + (kw - 1)          # flattened spatial shift of this tap
            if d == 0:
                tap = xf                          # center tap: no shift, no mask
            else:
                rolled = pltpu.roll(xf, shift=(-d) % HW, axis=1)
                tap = rolled * masks[t:t + 1, :]
            taps.append(tap)
    patches = jnp.concatenate(taps, axis=0)       # (9*Cin, HW) fp32

    # Single MXU matmul, bf16 operands, fp32 accumulation: (Cout, 9Cin) @ (9Cin, HW).
    acc = jnp.dot(w_ref[...], patches.astype(jnp.bfloat16),
                  preferred_element_type=jnp.float32)      # (Cout, HW) fp32
    # Conv bias intentionally omitted: exactly cancelled by the no-affine
    # InstanceNorm mean subtraction below.

    # InstanceNorm2d (no affine, biased variance, eps) over the spatial axis.
    mean = jnp.mean(acc, axis=1, keepdims=True)
    centered = acc - mean
    var = jnp.mean(centered * centered, axis=1, keepdims=True)
    y = centered * jax.lax.rsqrt(var + eps)

    # ReLU + residual add (mode='add' requires Cout == Cin).
    y = jnp.maximum(y, 0.0)
    o_ref[0] = (xf + y).astype(o_ref.dtype)

    # TODO(synk): dropout (train mode) and mode='cat' are not implemented; the module is
    # treated as eval-mode with mode='add'.


def _make_border_masks(H, W):
    """0/1 masks zeroing tap positions that would read across the zero padding."""
    HW = H * W
    masks = np.zeros((9, HW), dtype=np.float32)
    for kh in range(3):
        for kw in range(3):
            dy, dx = kh - 1, kw - 1
            m = np.zeros((H, W), dtype=np.float32)
            m[max(0, -dy):H - max(0, dy), max(0, -dx):W - max(0, dx)] = 1.0
            masks[kh * 3 + kw] = m.reshape(HW)
    return masks


def resnet_block_forward(x_nchw, weight_oihw, bias=None, *, eps=1e-5):
    """ResnetBlock forward (mode='add', norm='instance', relu=True, dropout off).

    x_nchw:      (N, C, H, W) float32, PyTorch layout
    weight_oihw: (C, C, 3, 3) conv weight
    bias:        (C,) conv bias -- accepted but unused: mathematically cancelled by the
                 no-affine InstanceNorm (the reference applies it and still matches).
    returns:     (N, C, H, W)
    """
    N, C, H, W = x_nchw.shape
    Cout, Cin, KH, KW = weight_oihw.shape
    assert (KH, KW) == (3, 3) and Cin == C and Cout == C, "mode='add' needs Cout == Cin"
    HW = H * W
    assert HW % 128 == 0, "H*W must be a multiple of 128 for the lane-dense layout"

    # NCHW -> (N, C, H*W): free reshape, no transpose / extra HBM round trip.
    xf = x_nchw.reshape(N, C, HW)
    # (Cout, Cin, 3, 3) -> (Cout, 9*Cin), columns ordered (kh*3+kw)*Cin + cin, as bf16.
    wmat = jnp.transpose(weight_oihw, (0, 2, 3, 1)).reshape(Cout, 9 * Cin)
    wmat = wmat.astype(jnp.bfloat16)
    masks = jnp.asarray(_make_border_masks(H, W))

    kernel = functools.partial(_resnet_block_kernel,
                               H=H, W=W, Cin=Cin, Cout=Cout, eps=eps)

    out = pl.pallas_call(
        kernel,
        out_shape=jax.ShapeDtypeStruct((N, Cout, HW), x_nchw.dtype),
        grid_spec=pltpu.PrefetchScalarGridSpec(
            num_scalar_prefetch=0,
            grid=(N,),
            in_specs=[
                pl.BlockSpec((1, Cin, HW), lambda n: (n, 0, 0)),
                pl.BlockSpec((Cout, 9 * Cin), lambda n: (0, 0)),
                pl.BlockSpec((9, HW), lambda n: (0, 0)),
            ],
            out_specs=pl.BlockSpec((1, Cout, HW), lambda n: (n, 0, 0)),
        ),
        compiler_params=pltpu.CompilerParams(
            dimension_semantics=("parallel",)),
    )(xf, wmat, masks)

    # TODO(synk): for large H*W*C (v7x: 64 MiB VMEM) add a row-block grid axis with a
    # 1-row halo and a two-pass (sum / sum-sq) InstanceNorm; for N==1 on megacore chips
    # add a second 'parallel' axis (e.g. channel groups) so both TensorCores get work.
    return out.reshape(N, Cout, H, W)


def _reference(x_nchw, weight_oihw, bias, eps=1e-5):
    # Pure-JAX fp32 reference (includes the conv bias, demonstrating it cancels).
    y = jax.lax.conv_general_dilated(
        x_nchw, weight_oihw, window_strides=(1, 1), padding=((1, 1), (1, 1)),
        dimension_numbers=("NCHW", "OIHW", "NCHW"))
    y = y + bias.reshape(1, -1, 1, 1)
    mean = jnp.mean(y, axis=(2, 3), keepdims=True)
    var = jnp.mean((y - mean) ** 2, axis=(2, 3), keepdims=True)
    y = (y - mean) * jax.lax.rsqrt(var + eps)
    y = jnp.maximum(y, 0.0)
    return x_nchw + y


if __name__ == "__main__":
    N, C, H, W = 2, 4, 16, 16  # in_channels = conv_out_channels = 4
    key = jax.random.PRNGKey(0)
    kx, kw, kb = jax.random.split(key, 3)
    x = jax.random.normal(kx, (N, C, H, W), dtype=jnp.float32)
    weight = jax.random.normal(kw, (C, C, 3, 3), dtype=jnp.float32) * 0.1
    bias = jax.random.normal(kb, (C,), dtype=jnp.float32) * 0.1

    out = jax.block_until_ready(resnet_block_forward(x, weight, bias))

    ref = jax.block_until_ready(_reference(x, weight, bias))
    assert out.shape == (N, C, H, W)
    # bf16 MXU operands (fp32 accumulation / norm stats): tolerance loosened accordingly.
    assert jnp.max(jnp.abs(out - ref)) < 5e-2, "mismatch vs reference"
    print("KERNEL_OK")
</pallas_src>

<mosaic_0001>
module attributes {stable_mosaic.version = 11 : i64} {
  func.func @_resnet_block_kernel(%arg0: i32, %arg1: memref<1x4x256xf32, #tpu.memory_space<vmem>>, %arg2: memref<4x36xbf16, #tpu.memory_space<vmem>>, %arg3: memref<9x256xf32, #tpu.memory_space<vmem>>, %arg4: memref<1x4x256xf32, #tpu.memory_space<vmem>>) attributes {dimension_semantics = [#tpu.dimension_semantics<parallel>], iteration_bounds = array<i64: 2>, scalar_prefetch = 0 : i64, scratch_operands = 0 : i64, tpu.core_type = #tpu.core_type<tc>, window_params = [{transform_indices = @transform_0, window_bounds = array<i64: 1, 4, 256>}, {pipeline_mode = #tpu.pipeline_mode<synchronous>, transform_indices = @transform_1, window_bounds = array<i64: 4, 36>}, {pipeline_mode = #tpu.pipeline_mode<synchronous>, transform_indices = @transform_2, window_bounds = array<i64: 9, 256>}, {transform_indices = @transform_3, window_bounds = array<i64: 1, 4, 256>}]} {
    %c0 = arith.constant 0 : index
    %c0_0 = arith.constant 0 : index
    %c0_1 = arith.constant 0 : index
    %0 = vector.load %arg1[%c0, %c0_0, %c0_1] : memref<1x4x256xf32, #tpu.memory_space<vmem>>, vector<1x4x256xf32>
    %1 = vector.shape_cast %0 : vector<1x4x256xf32> to vector<4x256xf32>
    %c0_2 = arith.constant 0 : index
    %c0_3 = arith.constant 0 : index
    %2 = vector.load %arg3[%c0_2, %c0_3] : memref<9x256xf32, #tpu.memory_space<vmem>>, vector<9x256xf32>
    %c17_i32 = arith.constant 17 : i32
    %3 = tpu.dynamic_rotate %1 by %c17_i32 dim 1 : vector<4x256xf32>, i32 -> vector<4x256xf32>
    %4 = vector.extract_strided_slice %2 {offsets = [0, 0], sizes = [1, 256], strides = [1, 1]} : vector<9x256xf32> to vector<1x256xf32>
    %5 = vector.broadcast %4 : vector<1x256xf32> to vector<4x256xf32>
    %6 = arith.mulf %3, %5 : vector<4x256xf32>
    %c16_i32 = arith.constant 16 : i32
    %7 = tpu.dynamic_rotate %1 by %c16_i32 dim 1 : vector<4x256xf32>, i32 -> vector<4x256xf32>
    %8 = vector.extract_strided_slice %2 {offsets = [1, 0], sizes = [1, 256], strides = [1, 1]} : vector<9x256xf32> to vector<1x256xf32>
    %9 = vector.broadcast %8 : vector<1x256xf32> to vector<4x256xf32>
    %10 = arith.mulf %7, %9 : vector<4x256xf32>
    %c15_i32 = arith.constant 15 : i32
    %11 = tpu.dynamic_rotate %1 by %c15_i32 dim 1 : vector<4x256xf32>, i32 -> vector<4x256xf32>
    %12 = vector.extract_strided_slice %2 {offsets = [2, 0], sizes = [1, 256], strides = [1, 1]} : vector<9x256xf32> to vector<1x256xf32>
    %13 = vector.broadcast %12 : vector<1x256xf32> to vector<4x256xf32>
    %14 = arith.mulf %11, %13 : vector<4x256xf32>
    %c1_i32 = arith.constant 1 : i32
    %15 = tpu.dynamic_rotate %1 by %c1_i32 dim 1 : vector<4x256xf32>, i32 -> vector<4x256xf32>
    %16 = vector.extract_strided_slice %2 {offsets = [3, 0], sizes = [1, 256], strides = [1, 1]} : vector<9x256xf32> to vector<1x256xf32>
    %17 = vector.broadcast %16 : vector<1x256xf32> to vector<4x256xf32>
    %18 = arith.mulf %15, %17 : vector<4x256xf32>
    %c255_i32 = arith.constant 255 : i32
    %19 = tpu.dynamic_rotate %1 by %c255_i32 dim 1 : vector<4x256xf32>, i32 -> vector<4x256xf32>
    %20 = vector.extract_strided_slice %2 {offsets = [5, 0], sizes = [1, 256], strides = [1, 1]} : vector<9x256xf32> to vector<1x256xf32>
    %21 = vector.broadcast %20 : vector<1x256xf32> to vector<4x256xf32>
    %22 = arith.mulf %19, %21 : vector<4x256xf32>
    %c241_i32 = arith.constant 241 : i32
    %23 = tpu.dynamic_rotate %1 by %c241_i32 dim 1 : vector<4x256xf32>, i32 -> vector<4x256xf32>
    %24 = vector.extract_strided_slice %2 {offsets = [6, 0], sizes = [1, 256], strides = [1, 1]} : vector<9x256xf32> to vector<1x256xf32>
    %25 = vector.broadcast %24 : vector<1x256xf32> to vector<4x256xf32>
    %26 = arith.mulf %23, %25 : vector<4x256xf32>
    %c240_i32 = arith.constant 240 : i32
    %27 = tpu.dynamic_rotate %1 by %c240_i32 dim 1 : vector<4x256xf32>, i32 -> vector<4x256xf32>
    %28 = vector.extract_strided_slice %2 {offsets = [7, 0], sizes = [1, 256], strides = [1, 1]} : vector<9x256xf32> to vector<1x256xf32>
    %29 = vector.broadcast %28 : vector<1x256xf32> to vector<4x256xf32>
    %30 = arith.mulf %27, %29 : vector<4x256xf32>
    %c239_i32 = arith.constant 239 : i32
    %31 = tpu.dynamic_rotate %1 by %c239_i32 dim 1 : vector<4x256xf32>, i32 -> vector<4x256xf32>
    %32 = vector.extract_strided_slice %2 {offsets = [8, 0], sizes = [1, 256], strides = [1, 1]} : vector<9x256xf32> to vector<1x256xf32>
    %33 = vector.broadcast %32 : vector<1x256xf32> to vector<4x256xf32>
    %34 = arith.mulf %31, %33 : vector<4x256xf32>
    %35 = tpu.concatenate %6, %10, %14, %18, %1, %22, %26, %30, %34 in 0 : vector<4x256xf32>, vector<4x256xf32>, vector<4x256xf32>, vector<4x256xf32>, vector<4x256xf32>, vector<4x256xf32>, vector<4x256xf32>, vector<4x256xf32>, vector<4x256xf32> -> vector<36x256xf32>
    %c0_4 = arith.constant 0 : index
    %c0_5 = arith.constant 0 : index
    %36 = vector.load %arg2[%c0_4, %c0_5] : memref<4x36xbf16, #tpu.memory_space<vmem>>, vector<4x36xbf16>
    %37 = arith.truncf %35 : vector<36x256xf32> to vector<36x256xbf16>
    %cst = arith.constant dense<0.000000e+00> : vector<4x256xf32>
    %38 = tpu.matmul %36, %37, %cst {dimension_numbers = #tpu.dot_dimension_numbers<[1], [0], [0], [1], [0, 0, 1, 1], [], []>} : vector<4x36xbf16>, vector<36x256xbf16>, vector<4x256xf32> -> vector<4x256xf32>
    %cst_6 = arith.constant dense<0.000000e+00> : vector<4xf32>
    %39 = vector.multi_reduction <add>, %38, %cst_6 [1] : vector<4x256xf32> to vector<4xf32>
    %40 = vector.shape_cast %39 : vector<4xf32> to vector<4x1xf32>
    %cst_7 = arith.constant 2.560000e+02 : f32
    %41 = vector.broadcast %cst_7 : f32 to vector<4x1xf32>
    %42 = arith.divf %40, %41 : vector<4x1xf32>
    %43 = vector.broadcast %42 : vector<4x1xf32> to vector<4x256xf32>
    %44 = arith.subf %38, %43 : vector<4x256xf32>
    %45 = arith.mulf %44, %44 : vector<4x256xf32>
    %cst_8 = arith.constant dense<0.000000e+00> : vector<4xf32>
    %46 = vector.multi_reduction <add>, %45, %cst_8 [1] : vector<4x256xf32> to vector<4xf32>
    %47 = vector.shape_cast %46 : vector<4xf32> to vector<4x1xf32>
    %cst_9 = arith.constant 2.560000e+02 : f32
    %48 = vector.broadcast %cst_9 : f32 to vector<4x1xf32>
    %49 = arith.divf %47, %48 : vector<4x1xf32>
    %cst_10 = arith.constant 9.99999974E-6 : f32
    %50 = vector.broadcast %cst_10 : f32 to vector<4x1xf32>
    %51 = arith.addf %49, %50 : vector<4x1xf32>
    %52 = math.rsqrt %51 : vector<4x1xf32>
    %53 = vector.broadcast %52 : vector<4x1xf32> to vector<4x256xf32>
    %54 = arith.mulf %44, %53 : vector<4x256xf32>
    %cst_11 = arith.constant 0.000000e+00 : f32
    %55 = vector.broadcast %cst_11 : f32 to vector<4x256xf32>
    %56 = arith.maximumf %54, %55 : vector<4x256xf32>
    %57 = arith.addf %1, %56 : vector<4x256xf32>
    %c0_12 = arith.constant 0 : index
    %c0_13 = arith.constant 0 : index
    %c0_14 = arith.constant 0 : index
    %58 = vector.load %arg4[%c0_12, %c0_13, %c0_14] : memref<1x4x256xf32, #tpu.memory_space<vmem>>, vector<1x4x256xf32>
    %59 = vector.shape_cast %58 : vector<1x4x256xf32> to vector<4x256xf32>
    %60 = vector.shape_cast %57 : vector<4x256xf32> to vector<1x4x256xf32>
    tpu.vector_store %arg4[%c0_12, %c0_13, %c0_14], %60 {strides = array<i32>} : memref<1x4x256xf32, #tpu.memory_space<vmem>>, vector<1x4x256xf32>,
    return
  }
  func.func @transform_0(%arg0: i32) -> (i32, i32, i32) {
    %c0_i32 = arith.constant 0 : i32
    %c0_i32_0 = arith.constant 0 : i32
    %c0_i32_1 = arith.constant 0 : i32
    return %arg0, %c0_i32, %c0_i32_0 : i32, i32, i32
  }
  func.func @transform_1(%arg0: i32) -> (i32, i32) {
    %c0_i32 = arith.constant 0 : i32
    %c0_i32_0 = arith.constant 0 : i32
    %c0_i32_1 = arith.constant 0 : i32
    return %c0_i32, %c0_i32_0 : i32, i32
  }
  func.func @transform_2(%arg0: i32) -> (i32, i32) {
    %c0_i32 = arith.constant 0 : i32
    %c0_i32_0 = arith.constant 0 : i32
    %c0_i32_1 = arith.constant 0 : i32
    return %c0_i32, %c0_i32_0 : i32, i32
  }
  func.func @transform_3(%arg0: i32) -> (i32, i32, i32) {
    %c0_i32 = arith.constant 0 : i32
    %c0_i32_0 = arith.constant 0 : i32
    %c0_i32_1 = arith.constant 0 : i32
    return %arg0, %c0_i32, %c0_i32_0 : i32, i32, i32
  }
}

</mosaic_0001>

<llo_original>
// kernel: tpu_custom_call.1
$region0: #{tpu_custom_call.1}
  #allocation0 [shape = 'u32[]', space=smem, size = 0x4, offset = 0x4, fixed_abs, tag = 'smem constant byte address 0x4 - core index']
  #allocation1 [shape = 'u32[144,128]{1,0:T(1,128)}', space=vmem, size = 0x12000, scoped, tag = 'internal scratch']
  %s0 = inlined_call_operand.hbm [shape: f32[2,4,256], index: 0, kind: input, shape index: {}]
  %s1 = inlined_call_operand.hbm [shape: bf16[4,36], index: 1, kind: input, shape index: {}]
  %s2 = inlined_call_operand.hbm [shape: f32[9,256], index: 2, kind: input, shape index: {}]
  %s3 = inlined_call_operand.hbm [shape: f32[2,4,256], index: 3, kind: output, shape index: {}]
  %s4 = sld [smem:[#allocation0]]
  $region57: #{tpu_custom_call.1} parent=0
    _
  %s6 = ssub.s32 1, %s4
  %s7 = scalar_select 0, %s6, %s4
  $region1: #{tpu_custom_call.1} parent=0
    #allocation2 [shape = 'u8[8192]{0}', space=vmem, size = 0x2000, scoped, tag = 'input window, operand 0']
    #allocation3 [shape = 's32[2]{0}', space=sflag, size = 0x8, scoped, tag = 'scoped memory for tpu_custom_call.1']
    #allocation4 [shape = 's32[2]{0}', space=sflag, size = 0x8, scoped, tag = 'scoped memory for tpu_custom_call.1']
    #allocation5 [shape = 'u8[1024]{0}', space=vmem, size = 0x400, scoped, tag = 'input window, operand 1, single buffered']
    #allocation6 [shape = 's32[1]{0}', space=sflag, size = 0x4, scoped, tag = 'scoped memory for tpu_custom_call.1']
    #allocation7 [shape = 'u8[16384]{0}', space=vmem, size = 0x4000, scoped, tag = 'input window, operand 2, single buffered']
    #allocation8 [shape = 'u8[8192]{0}', space=vmem, size = 0x2000, scoped, tag = 'output window, operand 0']
    %8 = vsyncpa [#allocation3], 0
    %s9 = scalar_lea.sflag [#allocation3], 1
    %10 = vsyncpa %s9, 0
    %11 = vsyncpa [#allocation6], 0
    %12 = vsyncpa [#allocation4], 0
    %s13 = scalar_lea.sflag [#allocation4], 1
    %14 = vsyncpa %s13, 0
    loop: start=0, step=1, limit=4
    $region2: #{tpu_custom_call.1} parent=1 // loop_pre_header
      _
    $region3: #{tpu_custom_call.1} parent=1 // loop_header
      %s16 = sphi 0, %s20
      %p17 = scmp.ge.s32.totalorder %s16, 4
      %s26 = sphi 0, %s28
      %s29 = sphi 0, %s26
      %s30 = sphi 0, %s29
      %s46 = sphi 0, %s30
      %s50 = sphi 0, %s50
      %s52 = sphi 0, %s50
      %s53 = sphi 0, %s52
      %s67 = sphi 0, %s53
      %s71 = sphi 0, %s71
      %s73 = sphi 0, %s71
      %s74 = sphi 0, %s73
      %s88 = sphi 0, %s74
      %s94 = sphi 0, %s96
      %s97 = sphi 0, %s94
      %s98 = sphi 0, %s97
      %s114 = sphi 0, %s98
    $region4: #{tpu_custom_call.1} parent=1 // loop_header_branch
      %19 = sbr.rel (%p17) target = $region8
    $region5: #{tpu_custom_call.1} parent=1 // loop_body
      %s21 = ssub.s32 %s16, 1
      %s22 = ssub.s32 %s16, 2
      %s23 = sadd.s32 %s16, 1
      %s24 = ssub.s32 %s16, %s23
      %p25 = scmp.eq.s32.totalorder %s24, 0
      %s27 = sadd.s32 %s26, 1
      %s28 = scalar_select %p25, %s26, %s27
      %p31 = pneg %p25
      %p32 = scmp.eq.s32.totalorder %s16, 1
      %p33 = por %p31, %p32
      %p34 = scmp.ne.s32.totalorder %s26, %s29
      %p35 = scmp.eq.s32.totalorder %s16, 0
      %p36 = por %p34, %p35
      %p37 = scmp.ne.s32.totalorder %s26, %s29
      %p38 = scmp.eq.s32.totalorder %s21, 1
      %p39 = por %p37, %p38
      %p40 = scmp.ne.s32.totalorder %s29, %s30
      %p41 = scmp.eq.s32.totalorder %s21, 0
      %p42 = por %p40, %p41
      %p43 = scmp.ne.s32.totalorder %s29, %s30
      %p44 = scmp.eq.s32.totalorder %s22, 1
      %p45 = por %p43, %p44
      %p47 = scmp.ne.s32.totalorder %s30, %s46
      %p48 = scmp.eq.s32.totalorder %s22, 0
      %p49 = por %p47, %p48
      %s51 = sadd.s32 %s50, 1
      %p54 = scmp.eq.s32.totalorder %s16, 1
      %p55 = scmp.ne.s32.totalorder %s50, %s52
      %p56 = scmp.eq.s32.totalorder %s16, 0
      %p57 = por %p55, %p56
      %p58 = scmp.ne.s32.totalorder %s50, %s52
      %p59 = scmp.eq.s32.totalorder %s21, 1
      %p60 = por %p58, %p59
      %p61 = scmp.ne.s32.totalorder %s52, %s53
      %p62 = scmp.eq.s32.totalorder %s21, 0
      %p63 = por %p61, %p62
      %p64 = scmp.ne.s32.totalorder %s52, %s53
      %p65 = scmp.eq.s32.totalorder %s22, 1
      %p66 = por %p64, %p65
      %p68 = scmp.ne.s32.totalorder %s53, %s67
      %p69 = scmp.eq.s32.totalorder %s22, 0
      %p70 = por %p68, %p69
      %s72 = sadd.s32 %s71, 1
      %p75 = scmp.eq.s32.totalorder %s16, 1
      %p76 = scmp.ne.s32.totalorder %s71, %s73
      %p77 = scmp.eq.s32.totalorder %s16, 0
      %p78 = por %p76, %p77
      %p79 = scmp.ne.s32.totalorder %s71, %s73
      %p80 = scmp.eq.s32.totalorder %s21, 1
      %p81 = por %p79, %p80
      %p82 = scmp.ne.s32.totalorder %s73, %s74
      %p83 = scmp.eq.s32.totalorder %s21, 0
      %p84 = por %p82, %p83
      %p85 = scmp.ne.s32.totalorder %s73, %s74
      %p86 = scmp.eq.s32.totalorder %s22, 1
      %p87 = por %p85, %p86
      %p89 = scmp.ne.s32.totalorder %s74, %s88
      %p90 = scmp.eq.s32.totalorder %s22, 0
      %p91 = por %p89, %p90
      %s92 = ssub.s32 %s16, %s23
      %p93 = scmp.eq.s32.totalorder %s92, 0
      %s95 = sadd.s32 %s94, 1
      %s96 = scalar_select %p93, %s94, %s95
      %p99 = pneg %p93
      %p100 = scmp.eq.s32.totalorder %s16, 1
      %p101 = por %p99, %p100
      %p102 = scmp.ne.s32.totalorder %s94, %s97
      %p103 = scmp.eq.s32.totalorder %s16, 0
      %p104 = por %p102, %p103
      %p105 = scmp.ne.s32.totalorder %s94, %s97
      %p106 = scmp.eq.s32.totalorder %s21, 1
      %p107 = por %p105, %p106
      %p108 = scmp.ne.s32.totalorder %s97, %s98
      %p109 = scmp.eq.s32.totalorder %s21, 0
      %p110 = por %p108, %p109
      %p111 = scmp.ne.s32.totalorder %s97, %s98
      %p112 = scmp.eq.s32.totalorder %s22, 1
      %p113 = por %p111, %p112
      %p115 = scmp.ne.s32.totalorder %s98, %s114
      %p116 = scmp.eq.s32.totalorder %s22, 0
      %p117 = por %p115, %p116
      %p118 = scmp.le.s32.totalorder 1, %s16
      %p119 = scmp.lt.s32.totalorder %s16, 3
      %p120 = pnand %p118, %p119
      %p121 = pneg %p120
      // Predicated region
      $region9: #{tpu_custom_call.1} parent=5 // pred_check
        _
      $region10: #{tpu_custom_call.1} parent=5 // pred_check_branch
        %123 = sbr.rel (%p120) target = $region12
      $region11: #{tpu_custom_call.1} parent=5 // pred_region
        %s124 = ssub.s32 %s16, 1
        // Predicated region
        $region13: #{tpu_custom_call.1} parent=11 // pred_check
          %p125 = pneg %p63
        $region14: #{tpu_custom_call.1} parent=11 // pred_check_branch
          %127 = sbr.rel (%p125) target = $region16
        $region15: #{tpu_custom_call.1} parent=11 // pred_region
          %s129 = ssub.s32 32, 32
          %130 = vsyncadd [#allocation6], %s129
          %s132 = sshll.u32 [#allocation5], 4
          %s133 = int_to_ptr.vmem [resolvable:$true] %s132
          %135 = dma.hbm_to_vmem [thread:$0]  %s1, 32, %s133, [#allocation6]
        $region16: #{tpu_custom_call.1} parent=11 // pred_fallthru
          _
        // Predicated region
        $region17: #{tpu_custom_call.1} parent=11 // pred_check
          %p136 = pneg %p84
        $region18: #{tpu_custom_call.1} parent=11 // pred_check_branch
          %138 = sbr.rel (%p136) target = $region20
        $region19: #{tpu_custom_call.1} parent=11 // pred_region
          %s140 = ssub.s32 512, 512
          %141 = vsyncadd [#allocation6], %s140
          %s142 = sshll.u32 [#allocation7], 4
          %s143 = int_to_ptr.vmem [resolvable:$true] %s142
          %148 = dma.hbm_to_vmem [thread:$0]  %s2, 512, %s143, [#allocation6], 256, 256, 16
        $region20: #{tpu_custom_call.1} parent=11 // pred_fallthru
          _
      $region12: #{tpu_custom_call.1} parent=5 // pred_fallthru
        _
      %p149 = scmp.lt.s32.totalorder %s16, 2
      // Predicated region
      $region21: #{tpu_custom_call.1} parent=5 // pred_check
        %p150 = pneg %p149
      $region22: #{tpu_custom_call.1} parent=5 // pred_check_branch
        %152 = sbr.rel (%p150) target = $region24
      $region23: #{tpu_custom_call.1} parent=5 // pred_region
        // Predicated region
        $region25: #{tpu_custom_call.1} parent=23 // pred_check
          %p153 = pneg %p36
        $region26: #{tpu_custom_call.1} parent=23 // pred_check_branch
          %155 = sbr.rel (%p153) target = $region28
        $region27: #{tpu_custom_call.1} parent=23 // pred_region
          %s156 = sand.u32 %s26, 1
          %s157 = scalar_lea.sflag [#allocation3], %s156
          %s158 = sand.u32 %s26, 1
          %s159 = smul.addr %s158, 8
          %s160 = scalar_lea.vmem [#allocation2], %s159
          %s162 = ssub.s32 128, 128
          %163 = vsyncadd %s157, %s162
          %s164 = smul.addr %s16, 2
          %s165 = smul.addr %s164, 64
          %s166 = scalar_lea.hbm %s0, %s165
          %s168 = sshll.u32 %s160, 4
          %s169 = int_to_ptr.vmem [resolvable:$true] %s168
          %171 = dma.hbm_to_vmem [thread:$0]  %s166, 128, %s169, %s157
        $region28: #{tpu_custom_call.1} parent=23 // pred_fallthru
          _
      $region24: #{tpu_custom_call.1} parent=5 // pred_fallthru
        _
      %p172 = scmp.le.s32.totalorder 1, %s16
      %p173 = scmp.lt.s32.totalorder %s16, 3
      %p174 = pnand %p172, %p173
      %p175 = pneg %p174
      // Predicated region
      $region29: #{tpu_custom_call.1} parent=5 // pred_check
        _
      $region30: #{tpu_custom_call.1} parent=5 // pred_check_branch
        %177 = sbr.rel (%p174) target = $region32
      $region31: #{tpu_custom_call.1} parent=5 // pred_region
        %s178 = ssub.s32 %s16, 1
        %s179 = sand.u32 %s29, 1
        %s180 = scalar_lea.sflag [#allocation3], %s179
        %s181 = sand.u32 %s29, 1
        %s182 = smul.addr %s181, 8
        %s183 = scalar_lea.vmem [#allocation2], %s182
        // Predicated region
        $region33: #{tpu_custom_call.1} parent=31 // pred_check
          %p184 = pneg %p42
        $region34: #{tpu_custom_call.1} parent=31 // pred_check_branch
          %186 = sbr.rel (%p184) target = $region36
        $region35: #{tpu_custom_call.1} parent=31 // pred_region
          %187 = dma.done %s180, 128
        $region36: #{tpu_custom_call.1} parent=31 // pred_fallthru
          _
        // Predicated region
        $region37: #{tpu_custom_call.1} parent=31 // pred_check
          %p188 = pneg %p63
        $region38: #{tpu_custom_call.1} parent=31 // pred_check_branch
          %190 = sbr.rel (%p188) target = $region40
        $region39: #{tpu_custom_call.1} parent=31 // pred_region
          %191 = dma.done [#allocation6], 32
        $region40: #{tpu_custom_call.1} parent=31 // pred_fallthru
          _
        // Predicated region
        $region41: #{tpu_custom_call.1} parent=31 // pred_check
          %p192 = pneg %p84
        $region42: #{tpu_custom_call.1} parent=31 // pred_check_branch
          %194 = sbr.rel (%p192) target = $region44
        $region43: #{tpu_custom_call.1} parent=31 // pred_region
          %195 = dma.done [#allocation6], 512
        $region44: #{tpu_custom_call.1} parent=31 // pred_fallthru
          _
        %s196 = sand.u32 %s29, 1
        %s197 = scalar_lea.sflag [#allocation3], %s196
        %s198 = sand.u32 %s29, 1
        %s199 = smul.addr %s198, 8
        %s200 = scalar_lea.vmem [#allocation2], %s199
        %p201 = pneg %p42
        %p202 = pneg %p39
        %p203 = pneg %p63
        %p204 = pneg %p60
        %p205 = pneg %p84
        %p206 = pneg %p81
        %p207 = pneg %p110
        %p208 = pneg %p107
        %s209 = sand.u32 %s97, 1
        %s210 = scalar_lea.sflag [#allocation4], %s209
        %s211 = sand.u32 %s97, 1
        %s212 = smul.addr %s211, 8
        %s213 = scalar_lea.vmem [#allocation8], %s212
        %v215 = vld [vmem:[%s183] sm:$0xff]
        %v216 = vld [vmem:[#allocation7] sm:$0xff]
        %v217 = vld [vmem:[#allocation7 + $0x8] sm:$0xff]
        %v218 = vld [vmem:[#allocation7 + $0x10] sm:$0x1]
        %v219 = vld [vmem:[#allocation7 + $0x18] sm:$0x1]
        %v221 = vcombine.high %v215, %v215
        %223 = vrot.lane.b32.xlu0 %v215, 17
        %v224 = vpop.permute.xlu0 %223
        %225 = vrot.lane.b32.xlu0 %v221, 17
        %v226 = vpop.permute.xlu0 %225
        %v227 = vlaneseq
        %v228 = vand.u32 %v227, 127
        %vm229 = vcmp.lt.s32.totalorder %v228, 17
        %v230 = vsel %vm229, %v224, %v226
        %v231 = vsel %vm229, %v226, %v224
        %v232 = vlaneseq
        %v233 = vshrl.u32 %v232, 7
        %v234 = vsub.s32 0, %v233
        %v235 = vrot.slane %v216, %v234
        %v236 = vlaneseq
        %v237 = vshrl.u32 %v236, 7
        %v238 = vsub.s32 0, %v237
        %v239 = vrot.slane %v217, %v238
        %v240 = vmul.f32 %v231, %v235
        %v241 = vmul.f32 %v230, %v239
        %242 = vrot.lane.b32.xlu0 %v215, 16
        %v243 = vpop.permute.xlu0 %242
        %244 = vrot.lane.b32.xlu0 %v221, 16
        %v245 = vpop.permute.xlu0 %244
        %vm246 = vcmp.lt.s32.totalorder %v228, 16
        %v247 = vsel %vm246, %v243, %v245
        %v248 = vsel %vm246, %v245, %v243
        %v249 = vlaneseq
        %v250 = vshrl.u32 %v249, 7
        %v251 = vsub.s32 1, %v250
        %v252 = vrot.slane %v216, %v251
        %v253 = vlaneseq
        %v254 = vshrl.u32 %v253, 7
        %v255 = vsub.s32 1, %v254
        %v256 = vrot.slane %v217, %v255
        %v257 = vmul.f32 %v248, %v252
        %v258 = vmul.f32 %v247, %v256
        %259 = vrot.lane.b32.xlu0 %v215, 15
        %v260 = vpop.permute.xlu0 %259
        %261 = vrot.lane.b32.xlu0 %v221, 15
        %v262 = vpop.permute.xlu0 %261
        %vm263 = vcmp.lt.s32.totalorder %v228, 15
        %v264 = vsel %vm263, %v260, %v262
        %v265 = vsel %vm263, %v262, %v260
        %v266 = vlaneseq
        %v267 = vshrl.u32 %v266, 7
        %v268 = vsub.s32 2, %v267
        %v269 = vrot.slane %v216, %v268
        %v270 = vlaneseq
        %v271 = vshrl.u32 %v270, 7
        %v272 = vsub.s32 2, %v271
        %v273 = vrot.slane %v217, %v272
        %v274 = vmul.f32 %v265, %v269
        %v275 = vmul.f32 %v264, %v273
        %276 = vrot.lane.b32.xlu0 %v215, 1
        %v277 = vpop.permute.xlu0 %276
        %278 = vrot.lane.b32.xlu0 %v221, 1
        %v279 = vpop.permute.xlu0 %278
        %vm280 = vcmp.lt.s32.totalorder %v228, 1
        %v281 = vsel %vm280, %v277, %v279
        %v282 = vsel %vm280, %v279, %v277
        %v283 = vlaneseq
        %v284 = vshrl.u32 %v283, 7
        %v285 = vsub.s32 3, %v284
        %v286 = vrot.slane %v216, %v285
        %v287 = vlaneseq
        %v288 = vshrl.u32 %v287, 7
        %v289 = vsub.s32 3, %v288
        %v290 = vrot.slane %v217, %v289
        %v291 = vmul.f32 %v282, %v286
        %v292 = vmul.f32 %v281, %v290
        %293 = vrot.lane.b32.xlu0 %v215, 127
        %v294 = vpop.permute.xlu0 %293
        %295 = vrot.lane.b32.xlu0 %v221, 127
        %v296 = vpop.permute.xlu0 %295
        %vm297 = vcmp.lt.s32.totalorder %v228, 127
        %v298 = vsel %vm297, %v294, %v296
        %v299 = vsel %vm297, %v296, %v294
        %v300 = vlaneseq
        %v301 = vshrl.u32 %v300, 7
        %v302 = vsub.s32 5, %v301
        %v303 = vrot.slane %v216, %v302
        %v304 = vlaneseq
        %v305 = vshrl.u32 %v304, 7
        %v306 = vsub.s32 5, %v305
        %v307 = vrot.slane %v217, %v306
        %v308 = vmul.f32 %v298, %v303
        %v309 = vmul.f32 %v299, %v307
        %310 = vrot.lane.b32.xlu0 %v215, 113
        %v311 = vpop.permute.xlu0 %310
        %312 = vrot.lane.b32.xlu0 %v221, 113
        %v313 = vpop.permute.xlu0 %312
        %vm314 = vcmp.lt.s32.totalorder %v228, 113
        %v315 = vsel %vm314, %v311, %v313
        %v316 = vsel %vm314, %v313, %v311
        %v317 = vlaneseq
        %v318 = vshrl.u32 %v317, 7
        %v319 = vsub.s32 6, %v318
        %v320 = vrot.slane %v216, %v319
        %v321 = vlaneseq
        %v322 = vshrl.u32 %v321, 7
        %v323 = vsub.s32 6, %v322
        %v324 = vrot.slane %v217, %v323
        %v325 = vmul.f32 %v315, %v320
        %v326 = vmul.f32 %v316, %v324
        %327 = vrot.lane.b32.xlu0 %v215, 112
        %v328 = vpop.permute.xlu0 %327
        %329 = vrot.lane.b32.xlu0 %v221, 112
        %v330 = vpop.permute.xlu0 %329
        %vm331 = vcmp.lt.s32.totalorder %v228, 112
        %v332 = vsel %vm331, %v328, %v330
        %v333 = vsel %vm331, %v330, %v328
        %v334 = vlaneseq
        %v335 = vshrl.u32 %v334, 7
        %v336 = vsub.s32 7, %v335
        %v337 = vrot.slane %v216, %v336
        %v338 = vlaneseq
        %v339 = vshrl.u32 %v338, 7
        %v340 = vsub.s32 7, %v339
        %v341 = vrot.slane %v217, %v340
        %v342 = vmul.f32 %v332, %v337
        %v343 = vmul.f32 %v333, %v341
        %344 = vrot.lane.b32.xlu0 %v215, 111
        %v345 = vpop.permute.xlu0 %344
        %346 = vrot.lane.b32.xlu0 %v221, 111
        %v347 = vpop.permute.xlu0 %346
        %vm348 = vcmp.lt.s32.totalorder %v228, 111
        %v349 = vsel %vm348, %v345, %v347
        %v350 = vsel %vm348, %v347, %v345
        %v351 = vlaneseq
        %v352 = vshrl.u32 %v351, 7
        %v353 = vsub.s32 0, %v352
        %v354 = vrot.slane %v218, %v353
        %v355 = vlaneseq
        %v356 = vshrl.u32 %v355, 7
        %v357 = vsub.s32 0, %v356
        %v358 = vrot.slane %v219, %v357
        %v359 = vmul.f32 %v349, %v354
        %v360 = vmul.f32 %v350, %v358
        %v363 = vrot.slane %v257, 4
        %v364 = vrot.slane %v258, 4
        %v369 = vrot.slane %v291, 4
        %v370 = vrot.slane %v292, 4
        %v375 = vrot.slane %v308, 4
        %v376 = vrot.slane %v309, 4
        %v381 = vrot.slane %v342, 4
        %v382 = vrot.slane %v343, 4
        %vm385 = vcmask 1043456
        %v386 = vsel %vm385, %v240, %v363
        %v387 = vsel %vm385, %v241, %v364
        %v388 = vsel %vm385, %v274, %v369
        %v389 = vsel %vm385, %v275, %v370
        %v390 = vsel %vm385, %v215, %v375
        %v391 = vsel %vm385, %v221, %v376
        %v392 = vsel %vm385, %v325, %v381
        %v393 = vsel %vm385, %v326, %v382
        %v394 = vld [vmem:[#allocation5] sm:$0x3]
        %v395 = vpack.c.bf16 %v388, %v386
        %v396 = vpack.c.bf16 %v389, %v387
        %v397 = vpack.c.bf16 %v392, %v390
        %v398 = vpack.c.bf16 %v393, %v391
        %v399 = vpack.c.bf16 %v359, %v359
        %v400 = vpack.c.bf16 %v360, %v360
        %vm401 = vcmask 293888
        %v403 = vsel %vm401, %v394, 0
        %vm405 = vcmask 1041408
        %v407 = vsel %vm405, %v399, 0
        %v410 = vsel %vm405, %v400, 0
        %412 = vmatprep.subr.bf16.mxu0 0
        %413 = vmatpush1.bf16.msra.mxu0 0
        %414 = vmatprep.subr.bf16.mxu0 0
        %415 = vmatpush1.bf16.msra.mxu0 0
        %416 = vmatprep.subr.bf16.mxu0 0
        %417 = vmatpush1.bf16.msra.mxu0 0
        %418 = vmatprep.subr.bf16.mxu0 0
        %419 = vmatpush1.bf16.msra.mxu0 0
        %420 = vmatprep.subr.bf16.mxu0 0
        %421 = vmatpush1.bf16.msra.mxu0 0
        %422 = vmatprep.subr.bf16.mxu0 %v410
        %423 = vmatpush1.bf16.msra.mxu0 %v407
        %424 = vmatprep.subr.bf16.mxu0 %v398
        %425 = vmatpush1.bf16.msra.mxu0 %v397
        %426 = vmatprep.subr.bf16.mxu0 %v396
        %427 = vmatpush1.bf16.msra.mxu0 %v395
        %428 = vmatprep.subr.bf16.mxu0 0
        %429 = vmatpush2.bf16.msra.mxu0 0
        %430 = vmatprep.subr.bf16.mxu0 0
        %431 = vmatpush2.bf16.msra.mxu0 0
        %432 = vmatprep.subr.bf16.mxu0 0
        %433 = vmatpush2.bf16.msra.mxu0 0
        %434 = vmatprep.subr.bf16.mxu0 0
        %435 = vmatpush2.bf16.msra.mxu0 0
        %436 = vmatprep.subr.bf16.mxu0 0
        %437 = vmatpush2.bf16.msra.mxu0 0
        %438 = vmatprep.subr.bf16.mxu0 0
        %439 = vmatpush2.bf16.msra.mxu0 0
        %440 = vmatprep.subr.bf16.mxu0 0
        %441 = vmatpush2.bf16.msra.mxu0 0
        %442 = vmatprep.subr.bf16.mxu0 0
        %443 = vmatpush2.bf16.msra.mxu0 0
        %444 = vmatprep.mubr.bf16.mxu0 0
        %445 = vmatmul.mubr.bf16.gmra.mxu0 %v403
        %v446 = vpop.f32.mrf.mxu0
        %v447 = vadd.f32 0.0, %v446
        %v448 = vpop.f32.mrf.mxu0
        %v449 = vadd.f32 0.0, %v448
        %v450 = vpop.f32.mrf.mxu0
        %v451 = vpop.f32.mrf.mxu0
        %452 = vdwg.mxu0
        %v453 = vsel %vm385, %v447, 0.0
        %v454 = vsel %vm385, %v449, 0.0
        %v455 = vadd.f32 %v453, %v454
        %456 = vadd.xlane.f32.xlu0 %v455
        %v457 = vpop.xlane.xlu0 %456
        %v458 = vrcp.pop 256.0
        %v459 = vmul.f32 %v457, %v458
        %v460 = vsub.f32 %v447, %v459
        %v461 = vsub.f32 %v449, %v459
        %v462 = vmul.f32 %v460, %v460
        %v463 = vmul.f32 %v461, %v461
        %v464 = vsel %vm385, %v462, 0.0
        %v465 = vsel %vm385, %v463, 0.0
        %v466 = vadd.f32 %v464, %v465
        %467 = vadd.xlane.f32.xlu0 %v466
        %v468 = vpop.xlane.xlu0 %467
        %v469 = vmul.f32 %v468, %v458
        %v470 = vadd.f32 %v469, 1e-05
        %v471 = vrsqrt.pop %v470
        %v472 = vmul.f32 %v460, %v471
        %v473 = vmul.f32 %v461, %v471
        %v474 = vmax.f32 %v472, 0.0
        %v475 = vmax.f32 %v473, 0.0
        %v478 = vcombine.low %v474, %v475
        %v480 = vadd.f32 %v215, %v478
        %481 = vst [vmem:[%s213] sm:$0xff] %v480
        %s482 = sand.u32 %s97, 1
        %s483 = scalar_lea.sflag [#allocation4], %s482
        %s484 = sand.u32 %s97, 1
        %s485 = smul.addr %s484, 8
        %s486 = scalar_lea.vmem [#allocation8], %s485
        // Predicated region
        $region45: #{tpu_custom_call.1} parent=31 // pred_check
          %p487 = pneg %p107
        $region46: #{tpu_custom_call.1} parent=31 // pred_check_branch
          %489 = sbr.rel (%p487) target = $region48
        $region47: #{tpu_custom_call.1} parent=31 // pred_region
          %s491 = ssub.s32 128, 128
          %492 = vsyncadd %s483, %s491
          %s493 = smul.addr %s21, 2
          %s494 = smul.addr %s493, 64
          %s495 = scalar_lea.hbm %s3, %s494
          %s497 = sshll.u32 %s486, 4
          %s498 = int_to_ptr.vmem [resolvable:$true] %s497
          %500 = dma.vmem_to_hbm [thread:$0]  %s498, 128, %s495, %s483
        $region48: #{tpu_custom_call.1} parent=31 // pred_fallthru
          _
      $region32: #{tpu_custom_call.1} parent=5 // pred_fallthru
        _
      %p501 = scmp.le.s32.totalorder 2, %s16
      // Predicated region
      $region49: #{tpu_custom_call.1} parent=5 // pred_check
        %p502 = pneg %p501
      $region50: #{tpu_custom_call.1} parent=5 // pred_check_branch
        %504 = sbr.rel (%p502) target = $region52
      $region51: #{tpu_custom_call.1} parent=5 // pred_region
        %s505 = ssub.s32 %s16, 2
        // Predicated region
        $region53: #{tpu_custom_call.1} parent=51 // pred_check
          %p506 = pneg %p113
        $region54: #{tpu_custom_call.1} parent=51 // pred_check_branch
          %508 = sbr.rel (%p506) target = $region56
        $region55: #{tpu_custom_call.1} parent=51 // pred_region
          %s509 = sand.u32 %s98, 1
          %s510 = scalar_lea.sflag [#allocation4], %s509
          %s511 = sand.u32 %s98, 1
          %s512 = smul.addr %s511, 8
          %s513 = scalar_lea.vmem [#allocation8], %s512
          %514 = dma.done %s510, 128
        $region56: #{tpu_custom_call.1} parent=51 // pred_fallthru
          _
      $region52: #{tpu_custom_call.1} parent=5 // pred_fallthru
        _
    $region6: #{tpu_custom_call.1} parent=1 // loop_footer
      %s20 = sadd.s32 1, %s16
    $region7: #{tpu_custom_call.1} parent=1 // loop_footer_branch
      %15 = sbr.rel target = $region3
    $region8: #{tpu_custom_call.1} parent=1 // loop_exit
      _
    %515 = vsyncpa [#allocation3], 1
    %s516 = scalar_lea.sflag [#allocation3], 1
    %517 = vsyncpa %s516, 1
    %518 = vsyncpa [#allocation6], 1
    %519 = vsyncpa [#allocation4], 1
    %s520 = scalar_lea.sflag [#allocation4], 1
    %521 = vsyncpa %s520, 1

</llo_original>
